<compile_context>
chip_gen: v7x
topology: tpu7x:2x2x1
jax: 0.10.0
libtpu: 0.0.40
codegen_flags: <defaults>
</compile_context>

<pallas_src>
import jax
import jax.numpy as jnp
from jax.experimental import pallas as pl
from jax.experimental.pallas import tpu as pltpu

_NUM_CLASSES = 23      # one-hot label width in the PyTorch module
_NUM_CLASSES_PAD = 32  # padded (sublane-aligned), zero rows are exact
_HID = 32              # merge_layer hidden width
_OUT = 2               # binary head
_OUT_PAD = 128         # lane-dense output store; sliced back to 2 in wrapper


def _fused_kernel(x_ref, y_ref, wx_ref, wy_ref, bh_ref, w2_ref, b2_ref, out_ref):
    """One batch tile of the folded forward pass.

    x_ref  : [TB, C, HW]  input, spatial flattened
    y_ref  : [TB, 32]     zero-padded one-hot label code
    wx_ref : [C, 32]      (w_pre @ w1 @ w_m1a) / HW   (pool + affine chain folded)
    wy_ref : [32, 32]     zero-padded (w_ce @ w_m1b)
    bh_ref : [1, 32]      fused pre-ReLU bias
    w2_ref : [32, 128]    zero-padded merge_layer[2] weight
    b2_ref : [1, 128]     zero-padded merge_layer[2] bias
    out_ref: [TB, 128]    lane-dense output (cols 0:2 are the real logits)
    """
    # Global average pool: 1/HW is already folded into wx, so a sum suffices.
    pooled = jnp.sum(x_ref[...], axis=-1)                            # [TB, C]

    h = (
        jnp.dot(pooled, wx_ref[...], preferred_element_type=jnp.float32)
        + jnp.dot(y_ref[...], wy_ref[...], preferred_element_type=jnp.float32)
        + bh_ref[...]
    )                                                                # [TB, 32]
    h = jnp.maximum(h, 0.0)                                          # ReLU

    out = jnp.dot(h, w2_ref[...], preferred_element_type=jnp.float32) + b2_ref[...]
    out_ref[...] = out.astype(out_ref.dtype)                         # [TB, 128]


def init_raw_params(key, in_channels):
    """Deterministic unfused parameters. PyTorch Linear weights are (out, in);
    we store them pre-transposed as (in, out) so forward is x @ W."""
    ks = jax.random.split(key, 10)

    def lin(kw, kb, fan_in, fan_out):
        bound = 1.0 / jnp.sqrt(float(fan_in))
        w = jax.random.uniform(kw, (fan_in, fan_out), jnp.float32, -bound, bound)
        b = jax.random.uniform(kb, (1, fan_out), jnp.float32, -bound, bound)
        return w, b

    w_pre, b_pre = lin(ks[0], ks[1], in_channels, 1000)   # pretrained stub FC
    w1, b1 = lin(ks[2], ks[3], 1000, 100)                 # self.layer1
    w_ce, b_ce = lin(ks[4], ks[5], 23, 100)               # self.class_embeding
    w_m1, b_m1 = lin(ks[6], ks[7], 200, 32)               # merge_layer[0]
    w_m2, b_m2 = lin(ks[8], ks[9], 32, 2)                 # merge_layer[2]

    return dict(w_pre=w_pre, b_pre=b_pre, w1=w1, b1=b1, w_ce=w_ce, b_ce=b_ce,
                w_m1=w_m1, b_m1=b_m1, w_m2=w_m2, b_m2=b_m2)


def fold_params(raw, hw):
    """Fold the affine chain before the ReLU (inference-only; exact up to FP
    reassociation). concat([xl, label],1) @ Wm1 == xl @ Wm1[:100] + label @ Wm1[100:],
    and every op before the ReLU is linear, so it collapses to:
        h = pooled @ W_x + y @ W_y + b_fused.
    """
    w_m1a = raw["w_m1"][:100, :]          # rows acting on the `x` half
    w_m1b = raw["w_m1"][100:, :]          # rows acting on the `label` half

    wx = (raw["w_pre"] @ raw["w1"] @ w_m1a) / float(hw)      # [C, 32], 1/HW folded
    wy = raw["w_ce"] @ w_m1b                                 # [23, 32]
    bh = (raw["b_pre"] @ raw["w1"] @ w_m1a
          + raw["b1"] @ w_m1a
          + raw["b_ce"] @ w_m1b
          + raw["b_m1"])                                     # [1, 32]

    # Zero-pad odd widths to hardware-friendly sizes (exact).
    wy_pad = jnp.zeros((_NUM_CLASSES_PAD, _HID), jnp.float32).at[:_NUM_CLASSES, :].set(wy)
    w2_pad = jnp.zeros((_HID, _OUT_PAD), jnp.float32).at[:, :_OUT].set(raw["w_m2"])
    b2_pad = jnp.zeros((1, _OUT_PAD), jnp.float32).at[:, :_OUT].set(raw["b_m2"])

    return dict(wx=wx, wy=wy_pad, bh=bh, w2=w2_pad, b2=b2_pad)


def reference_forward(x_nchw, y_onehot, raw):
    """Pure-JAX unfused forward, used only to validate the fused kernel."""
    pooled = jnp.mean(x_nchw, axis=(2, 3))
    feats = pooled @ raw["w_pre"] + raw["b_pre"]
    xl = feats @ raw["w1"] + raw["b1"]
    label = y_onehot @ raw["w_ce"] + raw["b_ce"]
    concat = jnp.concatenate([xl, label], axis=1)
    h = jnp.maximum(concat @ raw["w_m1"] + raw["b_m1"], 0.0)
    return h @ raw["w_m2"] + raw["b_m2"]


def myresnext50_align_forward(x_nchw, y_onehot, folded):
    B, C, H, W = x_nchw.shape
    hw = H * W
    x_flat = x_nchw.reshape(B, C, hw)                         # glue reshape only
    # Pad the 23-wide one-hot to 32 lanes (padded weight rows are zero).
    y_pad = jnp.zeros((B, _NUM_CLASSES_PAD), jnp.float32)
    y_pad = y_pad.at[:, :_NUM_CLASSES].set(y_onehot.astype(jnp.float32))

    # Batch tile: full batch at small B, 256-row MXU tiles at large B.
    tb = min(B, 256)
    grid = (pl.cdiv(B, tb),)

    flops = 2 * B * (C * _HID + _NUM_CLASSES_PAD * _HID + _HID * _OUT_PAD) + B * C * hw
    bytes_accessed = 4 * (
        x_flat.size + y_pad.size
        + folded["wx"].size + folded["wy"].size + folded["bh"].size
        + folded["w2"].size + folded["b2"].size
        + B * _OUT_PAD
    )

    out_pad = pl.pallas_call(
        _fused_kernel,
        out_shape=jax.ShapeDtypeStruct((B, _OUT_PAD), jnp.float32),
        grid=grid,
        in_specs=[
            pl.BlockSpec((tb, C, hw), lambda i: (i, 0, 0)),              # x tile
            pl.BlockSpec((tb, _NUM_CLASSES_PAD), lambda i: (i, 0)),      # y tile
            pl.BlockSpec((C, _HID), lambda i: (0, 0)),                   # wx (grid-invariant)
            pl.BlockSpec((_NUM_CLASSES_PAD, _HID), lambda i: (0, 0)),    # wy
            pl.BlockSpec((1, _HID), lambda i: (0, 0)),                   # bh
            pl.BlockSpec((_HID, _OUT_PAD), lambda i: (0, 0)),            # w2
            pl.BlockSpec((1, _OUT_PAD), lambda i: (0, 0)),               # b2
        ],
        out_specs=pl.BlockSpec((tb, _OUT_PAD), lambda i: (i, 0)),
        compiler_params=pltpu.CompilerParams(
            dimension_semantics=("parallel",),   # megacore sharding over batch on v7x
        ),
        cost_estimate=pl.CostEstimate(
            flops=flops, transcendentals=0, bytes_accessed=bytes_accessed),
    )(x_flat, y_pad, folded["wx"], folded["wy"], folded["bh"],
      folded["w2"], folded["b2"])

    return out_pad[:, :_OUT]                                   # logical slice back to [B, 2]


if __name__ == "__main__":
    key = jax.random.PRNGKey(0)
    k_x, k_y, k_p = jax.random.split(key, 3)

    # Small shapes consistent with the forward pass.
    B, C, H, W = 2, 4, 16, 16
    x = jax.random.normal(k_x, (B, C, H, W), jnp.float32)

    labels = jax.random.randint(k_y, (B,), 0, _NUM_CLASSES)
    y = jax.nn.one_hot(labels, _NUM_CLASSES, dtype=jnp.float32)

    raw = init_raw_params(k_p, C)
    folded = fold_params(raw, H * W)

    out = myresnext50_align_forward(x, y, folded)
    out = jax.block_until_ready(out)
    assert out.shape == (B, _OUT) and out.dtype == jnp.float32

    # Validate the folded kernel against the unfused pure-JAX reference.
    ref = reference_forward(x, y, raw)
    assert jnp.allclose(out, ref, rtol=1e-3, atol=1e-3), (out, ref)

    print("KERNEL_OK")
</pallas_src>

<mosaic_0001>
module attributes {stable_mosaic.version = 11 : i64} {
  func.func @_fused_kernel(%arg0: i32, %arg1: memref<2x4x256xf32, #tpu.memory_space<vmem>>, %arg2: memref<2x32xf32, #tpu.memory_space<vmem>>, %arg3: memref<4x32xf32, #tpu.memory_space<vmem>>, %arg4: memref<32x32xf32, #tpu.memory_space<vmem>>, %arg5: memref<1x32xf32, #tpu.memory_space<vmem>>, %arg6: memref<32x128xf32, #tpu.memory_space<vmem>>, %arg7: memref<1x128xf32, #tpu.memory_space<vmem>>, %arg8: memref<2x128xf32, #tpu.memory_space<vmem>>) attributes {dimension_semantics = [#tpu.dimension_semantics<parallel>], iteration_bounds = array<i64: 1>, scalar_prefetch = 0 : i64, scratch_operands = 0 : i64, tpu.core_type = #tpu.core_type<tc>, window_params = [{transform_indices = @transform_0, window_bounds = array<i64: 2, 4, 256>}, {transform_indices = @transform_1, window_bounds = array<i64: 2, 32>}, {pipeline_mode = #tpu.pipeline_mode<synchronous>, transform_indices = @transform_2, window_bounds = array<i64: 4, 32>}, {pipeline_mode = #tpu.pipeline_mode<synchronous>, transform_indices = @transform_3, window_bounds = array<i64: 32, 32>}, {pipeline_mode = #tpu.pipeline_mode<synchronous>, transform_indices = @transform_4, window_bounds = array<i64: 1, 32>}, {pipeline_mode = #tpu.pipeline_mode<synchronous>, transform_indices = @transform_5, window_bounds = array<i64: 32, 128>}, {pipeline_mode = #tpu.pipeline_mode<synchronous>, transform_indices = @transform_6, window_bounds = array<i64: 1, 128>}, {transform_indices = @transform_7, window_bounds = array<i64: 2, 128>}]} {
    %c0 = arith.constant 0 : index
    %c0_0 = arith.constant 0 : index
    %c0_1 = arith.constant 0 : index
    %0 = vector.load %arg1[%c0, %c0_0, %c0_1] : memref<2x4x256xf32, #tpu.memory_space<vmem>>, vector<2x4x256xf32>
    %cst = arith.constant dense<0.000000e+00> : vector<2x4xf32>
    %1 = vector.multi_reduction <add>, %0, %cst [2] : vector<2x4x256xf32> to vector<2x4xf32>
    %c0_2 = arith.constant 0 : index
    %c0_3 = arith.constant 0 : index
    %2 = vector.load %arg3[%c0_2, %c0_3] : memref<4x32xf32, #tpu.memory_space<vmem>>, vector<4x32xf32>
    %cst_4 = arith.constant dense<0.000000e+00> : vector<2x32xf32>
    %3 = tpu.matmul %1, %2, %cst_4 {dimension_numbers = #tpu.dot_dimension_numbers<[1], [0], [0], [1], [0, 0, 1, 1], [], []>} : vector<2x4xf32>, vector<4x32xf32>, vector<2x32xf32> -> vector<2x32xf32>
    %c0_5 = arith.constant 0 : index
    %c0_6 = arith.constant 0 : index
    %4 = vector.load %arg2[%c0_5, %c0_6] : memref<2x32xf32, #tpu.memory_space<vmem>>, vector<2x32xf32>
    %c0_7 = arith.constant 0 : index
    %c0_8 = arith.constant 0 : index
    %5 = vector.load %arg4[%c0_7, %c0_8] : memref<32x32xf32, #tpu.memory_space<vmem>>, vector<32x32xf32>
    %cst_9 = arith.constant dense<0.000000e+00> : vector<2x32xf32>
    %6 = tpu.matmul %4, %5, %cst_9 {dimension_numbers = #tpu.dot_dimension_numbers<[1], [0], [0], [1], [0, 0, 1, 1], [], []>} : vector<2x32xf32>, vector<32x32xf32>, vector<2x32xf32> -> vector<2x32xf32>
    %7 = arith.addf %3, %6 : vector<2x32xf32>
    %c0_10 = arith.constant 0 : index
    %c0_11 = arith.constant 0 : index
    %8 = vector.load %arg5[%c0_10, %c0_11] : memref<1x32xf32, #tpu.memory_space<vmem>>, vector<1x32xf32>
    %9 = vector.broadcast %8 : vector<1x32xf32> to vector<2x32xf32>
    %10 = arith.addf %7, %9 : vector<2x32xf32>
    %cst_12 = arith.constant 0.000000e+00 : f32
    %11 = vector.broadcast %cst_12 : f32 to vector<2x32xf32>
    %12 = arith.maximumf %10, %11 : vector<2x32xf32>
    %c0_13 = arith.constant 0 : index
    %c0_14 = arith.constant 0 : index
    %13 = vector.load %arg6[%c0_13, %c0_14] : memref<32x128xf32, #tpu.memory_space<vmem>>, vector<32x128xf32>
    %cst_15 = arith.constant dense<0.000000e+00> : vector<2x128xf32>
    %14 = tpu.matmul %12, %13, %cst_15 {dimension_numbers = #tpu.dot_dimension_numbers<[1], [0], [0], [1], [0, 0, 1, 1], [], []>} : vector<2x32xf32>, vector<32x128xf32>, vector<2x128xf32> -> vector<2x128xf32>
    %c0_16 = arith.constant 0 : index
    %c0_17 = arith.constant 0 : index
    %15 = vector.load %arg7[%c0_16, %c0_17] : memref<1x128xf32, #tpu.memory_space<vmem>>, vector<1x128xf32>
    %16 = vector.broadcast %15 : vector<1x128xf32> to vector<2x128xf32>
    %17 = arith.addf %14, %16 : vector<2x128xf32>
    %c0_18 = arith.constant 0 : index
    %c0_19 = arith.constant 0 : index
    %18 = vector.load %arg8[%c0_18, %c0_19] : memref<2x128xf32, #tpu.memory_space<vmem>>, vector<2x128xf32>
    tpu.vector_store %arg8[%c0_18, %c0_19], %17 {strides = array<i32>} : memref<2x128xf32, #tpu.memory_space<vmem>>, vector<2x128xf32>,
    return
  }
  func.func @transform_0(%arg0: i32) -> (i32, i32, i32) {
    %c0_i32 = arith.constant 0 : i32
    %c0_i32_0 = arith.constant 0 : i32
    %c0_i32_1 = arith.constant 0 : i32
    return %arg0, %c0_i32, %c0_i32_0 : i32, i32, i32
  }
  func.func @transform_1(%arg0: i32) -> (i32, i32) {
    %c0_i32 = arith.constant 0 : i32
    %c0_i32_0 = arith.constant 0 : i32
    return %arg0, %c0_i32 : i32, i32
  }
  func.func @transform_2(%arg0: i32) -> (i32, i32) {
    %c0_i32 = arith.constant 0 : i32
    %c0_i32_0 = arith.constant 0 : i32
    %c0_i32_1 = arith.constant 0 : i32
    return %c0_i32, %c0_i32_0 : i32, i32
  }
  func.func @transform_3(%arg0: i32) -> (i32, i32) {
    %c0_i32 = arith.constant 0 : i32
    %c0_i32_0 = arith.constant 0 : i32
    %c0_i32_1 = arith.constant 0 : i32
    return %c0_i32, %c0_i32_0 : i32, i32
  }
  func.func @transform_4(%arg0: i32) -> (i32, i32) {
    %c0_i32 = arith.constant 0 : i32
    %c0_i32_0 = arith.constant 0 : i32
    %c0_i32_1 = arith.constant 0 : i32
    return %c0_i32, %c0_i32_0 : i32, i32
  }
  func.func @transform_5(%arg0: i32) -> (i32, i32) {
    %c0_i32 = arith.constant 0 : i32
    %c0_i32_0 = arith.constant 0 : i32
    %c0_i32_1 = arith.constant 0 : i32
    return %c0_i32, %c0_i32_0 : i32, i32
  }
  func.func @transform_6(%arg0: i32) -> (i32, i32) {
    %c0_i32 = arith.constant 0 : i32
    %c0_i32_0 = arith.constant 0 : i32
    %c0_i32_1 = arith.constant 0 : i32
    return %c0_i32, %c0_i32_0 : i32, i32
  }
  func.func @transform_7(%arg0: i32) -> (i32, i32) {
    %c0_i32 = arith.constant 0 : i32
    %c0_i32_0 = arith.constant 0 : i32
    return %arg0, %c0_i32 : i32, i32
  }
}

</mosaic_0001>

<llo_original>
// kernel: tpu_custom_call.1
$region0: #{tpu_custom_call.1}
  #allocation0 [shape = 'u32[]', space=smem, size = 0x4, offset = 0x4, fixed_abs, tag = 'smem constant byte address 0x4 - core index']
  #allocation1 [shape = 'u32[144,128]{1,0:T(1,128)}', space=vmem, size = 0x12000, scoped, tag = 'internal scratch']
  %s0 = inlined_call_operand.hbm [shape: f32[2,4,256], index: 0, kind: input, shape index: {}]
  %s1 = inlined_call_operand.vmem [shape: f32[2,32], index: 1, kind: input, shape index: {}]
  %s2 = inlined_call_operand.vmem [shape: f32[4,32], index: 2, kind: input, shape index: {}]
  %s3 = inlined_call_operand.hbm [shape: f32[32,32], index: 3, kind: input, shape index: {}]
  %s4 = inlined_call_operand.vmem [shape: f32[1,32], index: 4, kind: input, shape index: {}]
  %s5 = inlined_call_operand.hbm [shape: f32[32,128], index: 5, kind: input, shape index: {}]
  %s6 = inlined_call_operand.vmem [shape: f32[1,128], index: 6, kind: input, shape index: {}]
  %s7 = inlined_call_operand.hbm [shape: f32[2,128], index: 7, kind: output, shape index: {}]
  %s8 = sld [smem:[#allocation0]]
  $region50: #{tpu_custom_call.1} parent=0
    _
  %s10 = ssub.s32 1, %s8
  %s11 = scalar_select 0, %s10, %s8
  $region1: #{tpu_custom_call.1} parent=0
    #allocation2 [shape = 'u8[8192]{0}', space=vmem, size = 0x2000, scoped, tag = 'input window, operand 0, single buffered']
    #allocation3 [shape = 's32[1]{0}', space=sflag, size = 0x4, scoped, tag = 'scoped memory for tpu_custom_call.1']
    #allocation4 [shape = 's32[1]{0}', space=sflag, size = 0x4, scoped, tag = 'scoped memory for tpu_custom_call.1']
    #allocation5 [shape = 'u8[16384]{0}', space=vmem, size = 0x4000, scoped, tag = 'input window, operand 3, single buffered']
    #allocation6 [shape = 's32[1]{0}', space=sflag, size = 0x4, scoped, tag = 'scoped memory for tpu_custom_call.1']
    #allocation7 [shape = 'u8[16384]{0}', space=vmem, size = 0x4000, scoped, tag = 'input window, operand 5, single buffered']
    #allocation8 [shape = 'u8[1024]{0}', space=vmem, size = 0x400, scoped, tag = 'output window, operand 0, single buffered']
    %12 = vsyncpa [#allocation3], 0
    %13 = vsyncpa [#allocation6], 0
    %14 = vsyncpa [#allocation4], 0
    // Predicated region
    $region2: #{tpu_custom_call.1} parent=1 // pred_check
      _
    $region3: #{tpu_custom_call.1} parent=1 // pred_check_branch
      %16 = sbr.rel (0) target = $region5
    $region4: #{tpu_custom_call.1} parent=1 // pred_region
      %s18 = ssub.s32 256, 256
      %19 = vsyncadd [#allocation3], %s18
      %s20 = sshll.u32 [#allocation2], 4
      %s21 = int_to_ptr.vmem [resolvable:$true] %s20
      %26 = dma.hbm_to_vmem [thread:$0]  %s0, 256, %s21, [#allocation3], 128, 128, 8
    $region5: #{tpu_custom_call.1} parent=1 // pred_fallthru
      _
    // Predicated region
    $region6: #{tpu_custom_call.1} parent=1 // pred_check
      _
    $region7: #{tpu_custom_call.1} parent=1 // pred_check_branch
      %28 = sbr.rel (0) target = $region9
    $region8: #{tpu_custom_call.1} parent=1 // pred_region
      _
    $region9: #{tpu_custom_call.1} parent=1 // pred_fallthru
      _
    // Predicated region
    $region10: #{tpu_custom_call.1} parent=1 // pred_check
      _
    $region11: #{tpu_custom_call.1} parent=1 // pred_check_branch
      %30 = sbr.rel (0) target = $region13
    $region12: #{tpu_custom_call.1} parent=1 // pred_region
      _
    $region13: #{tpu_custom_call.1} parent=1 // pred_fallthru
      _
    // Predicated region
    $region14: #{tpu_custom_call.1} parent=1 // pred_check
      _
    $region15: #{tpu_custom_call.1} parent=1 // pred_check_branch
      %32 = sbr.rel (0) target = $region17
    $region16: #{tpu_custom_call.1} parent=1 // pred_region
      %s34 = ssub.s32 512, 512
      %35 = vsyncadd [#allocation6], %s34
      %s36 = sshll.u32 [#allocation5], 4
      %s37 = int_to_ptr.vmem [resolvable:$true] %s36
      %42 = dma.hbm_to_vmem [thread:$0]  %s3, 512, %s37, [#allocation6], 128, 128, 8
    $region17: #{tpu_custom_call.1} parent=1 // pred_fallthru
      _
    // Predicated region
    $region18: #{tpu_custom_call.1} parent=1 // pred_check
      _
    $region19: #{tpu_custom_call.1} parent=1 // pred_check_branch
      %44 = sbr.rel (0) target = $region21
    $region20: #{tpu_custom_call.1} parent=1 // pred_region
      _
    $region21: #{tpu_custom_call.1} parent=1 // pred_fallthru
      _
    // Predicated region
    $region22: #{tpu_custom_call.1} parent=1 // pred_check
      _
    $region23: #{tpu_custom_call.1} parent=1 // pred_check_branch
      %46 = sbr.rel (0) target = $region25
    $region24: #{tpu_custom_call.1} parent=1 // pred_region
      %s48 = ssub.s32 512, 512
      %49 = vsyncadd [#allocation6], %s48
      %s50 = sshll.u32 [#allocation7], 4
      %s51 = int_to_ptr.vmem [resolvable:$true] %s50
      %56 = dma.hbm_to_vmem [thread:$0]  %s5, 512, %s51, [#allocation6], 128, 128, 8
    $region25: #{tpu_custom_call.1} parent=1 // pred_fallthru
      _
    // Predicated region
    $region26: #{tpu_custom_call.1} parent=1 // pred_check
      _
    $region27: #{tpu_custom_call.1} parent=1 // pred_check_branch
      %58 = sbr.rel (0) target = $region29
    $region28: #{tpu_custom_call.1} parent=1 // pred_region
      _
    $region29: #{tpu_custom_call.1} parent=1 // pred_fallthru
      _
    // Predicated region
    $region30: #{tpu_custom_call.1} parent=1 // pred_check
      _
    $region31: #{tpu_custom_call.1} parent=1 // pred_check_branch
      %60 = sbr.rel (0) target = $region33
    $region32: #{tpu_custom_call.1} parent=1 // pred_region
      %61 = dma.done [#allocation3], 256
    $region33: #{tpu_custom_call.1} parent=1 // pred_fallthru
      _
    // Predicated region
    $region34: #{tpu_custom_call.1} parent=1 // pred_check
      _
    $region35: #{tpu_custom_call.1} parent=1 // pred_check_branch
      %63 = sbr.rel (0) target = $region37
    $region36: #{tpu_custom_call.1} parent=1 // pred_region
      %64 = dma.done [#allocation6], 512
    $region37: #{tpu_custom_call.1} parent=1 // pred_fallthru
      _
    // Predicated region
    $region38: #{tpu_custom_call.1} parent=1 // pred_check
      _
    $region39: #{tpu_custom_call.1} parent=1 // pred_check_branch
      %66 = sbr.rel (0) target = $region41
    $region40: #{tpu_custom_call.1} parent=1 // pred_region
      %67 = dma.done [#allocation6], 512
    $region41: #{tpu_custom_call.1} parent=1 // pred_fallthru
      _
    %v68 = vld [vmem:[#allocation2] sm:$0xff]
    %v69 = vld [vmem:[#allocation2 + $0x8] sm:$0xff]
    %v72 = vcombine.high %v68, %v68
    %v73 = vcombine.high %v69, %v69
    %vm76 = vcmask 1043456
    %v77 = vsel %vm76, %v68, 0.0
    %v78 = vsel %vm76, %v72, 0.0
    %v79 = vadd.f32 %v77, %v78
    %80 = vadd.xlane.f32.xlu0 %v79
    %v81 = vpop.xlane.xlu0 %80
    %v82 = vsel %vm76, %v69, 0.0
    %v83 = vsel %vm76, %v73, 0.0
    %v84 = vadd.f32 %v82, %v83
    %85 = vadd.xlane.f32.xlu0 %v84
    %v86 = vpop.xlane.xlu0 %85
    %v87 = vld [vmem:[%s2] sm:$0xf]
    %v88 = vld [vmem:[%s1] sm:$0x3]
    %v89 = vld [vmem:[#allocation5] sm:$0xff]
    %v90 = vld [vmem:[#allocation5 + $0x8] sm:$0xff]
    %v91 = vld [vmem:[#allocation5 + $0x10] sm:$0xff]
    %v92 = vld [vmem:[#allocation5 + $0x18] sm:$0xff]
    %vm93 = vcmask 261120
    %v95 = vsel %vm93, %v88, 0
    %97 = vmatprep.subr.mxu0 0.0
    %98 = vmatpush1.msra.mxu0 %v89
    %99 = vmatprep.subr.mxu0 0.0
    %100 = vmatpush1.msra.mxu0 %v90
    %101 = vmatprep.subr.mxu0 0.0
    %102 = vmatpush1.msra.mxu0 %v91
    %103 = vmatprep.subr.mxu0 0.0
    %104 = vmatpush1.msra.mxu0 %v92
    %105 = vmatprep.subr.mxu0 0.0
    %106 = vmatpush1.msra.mxu0 0.0
    %107 = vmatprep.subr.mxu0 0.0
    %108 = vmatpush1.msra.mxu0 0.0
    %109 = vmatprep.subr.mxu0 0.0
    %110 = vmatpush1.msra.mxu0 0.0
    %111 = vmatprep.subr.mxu0 0.0
    %112 = vmatpush1.msra.mxu0 0.0
    %113 = vmatprep.subr.mxu0 0.0
    %114 = vmatpush1.msra.mxu0 0.0
    %115 = vmatprep.subr.mxu0 0.0
    %116 = vmatpush1.msra.mxu0 0.0
    %117 = vmatprep.subr.mxu0 0.0
    %118 = vmatpush1.msra.mxu0 0.0
    %119 = vmatprep.subr.mxu0 0.0
    %120 = vmatpush1.msra.mxu0 0.0
    %121 = vmatprep.subr.mxu0 0.0
    %122 = vmatpush1.msra.mxu0 0.0
    %123 = vmatprep.subr.mxu0 0.0
    %124 = vmatpush1.msra.mxu0 0.0
    %125 = vmatprep.subr.mxu0 0.0
    %126 = vmatpush1.msra.mxu0 0.0
    %127 = vmatprep.subr.mxu0 0.0
    %128 = vmatpush1.msra.mxu0 0.0
    %129 = vmatprep.subr.mxu0 0.0
    %130 = vmatpush1.msra.mxu0 0.0
    %131 = vmatprep.subr.mxu0 0.0
    %132 = vmatpush1.msra.mxu0 0.0
    %133 = vmatprep.subr.mxu0 0.0
    %134 = vmatpush1.msra.mxu0 0.0
    %135 = vmatprep.subr.mxu0 0.0
    %136 = vmatpush1.msra.mxu0 0.0
    %137 = vmatprep.subr.mxu0 0.0
    %138 = vmatpush1.msra.mxu0 0.0
    %139 = vmatprep.subr.mxu0 0.0
    %140 = vmatpush1.msra.mxu0 0.0
    %141 = vmatprep.subr.mxu0 0.0
    %142 = vmatpush1.msra.mxu0 0.0
    %143 = vmatprep.subr.mxu0 0.0
    %144 = vmatpush1.msra.mxu0 0.0
    %145 = vmatprep.subr.mxu0 0.0
    %146 = vmatpush1.msra.mxu0 0.0
    %147 = vmatprep.subr.mxu0 0.0
    %148 = vmatpush1.msra.mxu0 0.0
    %149 = vmatprep.subr.mxu0 0.0
    %150 = vmatpush1.msra.mxu0 0.0
    %151 = vmatprep.subr.mxu0 0.0
    %152 = vmatpush1.msra.mxu0 0.0
    %153 = vmatprep.subr.mxu0 0.0
    %154 = vmatpush1.msra.mxu0 0.0
    %155 = vmatprep.subr.mxu0 0.0
    %156 = vmatpush1.msra.mxu0 0.0
    %157 = vmatprep.subr.mxu0 0.0
    %158 = vmatpush1.msra.mxu0 0.0
    %159 = vmatprep.subr.mxu0 0.0
    %160 = vmatpush1.msra.mxu0 0.0
    %161 = vmatprep.mubr.f32.mxu0 0.0
    %162 = vmatmul.mubr.f32.gmra.mrb[0].mxu0 %v95
    %v163 = vpop.f32.mrb[0].mxu0
    %v164 = vadd.f32 0.0, %v163
    %v165 = vpop.f32.mrb[0].mxu0
    %166 = vdwg.mxu0
    %v169 = vlaneseq
    %v170 = vand.u32 %v169, 127
    %v171 = vlaneseq
    %v172 = vshrl.u32 %v171, 7
    %v173 = vsub.s32 %v170, %v172
    %v174 = vrot.slane %v81, %v173
    %v175 = vlaneseq
    %v176 = vshrl.u32 %v175, 7
    %v177 = vsub.s32 %v170, %v176
    %v178 = vrot.slane %v86, %v177
    %vm179 = vcmask 1041409
    %v180 = vsel %vm179, %v178, %v174
    %vm181 = vcmask 31744
    %v182 = vsel %vm181, %v180, 0
    %v185 = vsel %vm76, %v87, 0
    %187 = vmatprep.subr.mxu0 0.0
    %188 = vmatpush1.msra.mxu0 %v185
    %189 = vmatprep.subr.mxu0 0.0
    %190 = vmatpush1.msra.mxu0 0.0
    %191 = vmatprep.subr.mxu0 0.0
    %192 = vmatpush1.msra.mxu0 0.0
    %193 = vmatprep.subr.mxu0 0.0
    %194 = vmatpush1.msra.mxu0 0.0
    %195 = vmatprep.subr.mxu0 0.0
    %196 = vmatpush1.msra.mxu0 0.0
    %197 = vmatprep.subr.mxu0 0.0
    %198 = vmatpush1.msra.mxu0 0.0
    %199 = vmatprep.subr.mxu0 0.0
    %200 = vmatpush1.msra.mxu0 0.0
    %201 = vmatprep.subr.mxu0 0.0
    %202 = vmatpush1.msra.mxu0 0.0
    %203 = vmatprep.subr.mxu0 0.0
    %204 = vmatpush1.msra.mxu0 0.0
    %205 = vmatprep.subr.mxu0 0.0
    %206 = vmatpush1.msra.mxu0 0.0
    %207 = vmatprep.subr.mxu0 0.0
    %208 = vmatpush1.msra.mxu0 0.0
    %209 = vmatprep.subr.mxu0 0.0
    %210 = vmatpush1.msra.mxu0 0.0
    %211 = vmatprep.subr.mxu0 0.0
    %212 = vmatpush1.msra.mxu0 0.0
    %213 = vmatprep.subr.mxu0 0.0
    %214 = vmatpush1.msra.mxu0 0.0
    %215 = vmatprep.subr.mxu0 0.0
    %216 = vmatpush1.msra.mxu0 0.0
    %217 = vmatprep.subr.mxu0 0.0
    %218 = vmatpush1.msra.mxu0 0.0
    %219 = vmatprep.subr.mxu0 0.0
    %220 = vmatpush1.msra.mxu0 0.0
    %221 = vmatprep.subr.mxu0 0.0
    %222 = vmatpush1.msra.mxu0 0.0
    %223 = vmatprep.subr.mxu0 0.0
    %224 = vmatpush1.msra.mxu0 0.0
    %225 = vmatprep.subr.mxu0 0.0
    %226 = vmatpush1.msra.mxu0 0.0
    %227 = vmatprep.subr.mxu0 0.0
    %228 = vmatpush1.msra.mxu0 0.0
    %229 = vmatprep.subr.mxu0 0.0
    %230 = vmatpush1.msra.mxu0 0.0
    %231 = vmatprep.subr.mxu0 0.0
    %232 = vmatpush1.msra.mxu0 0.0
    %233 = vmatprep.subr.mxu0 0.0
    %234 = vmatpush1.msra.mxu0 0.0
    %235 = vmatprep.subr.mxu0 0.0
    %236 = vmatpush1.msra.mxu0 0.0
    %237 = vmatprep.subr.mxu0 0.0
    %238 = vmatpush1.msra.mxu0 0.0
    %239 = vmatprep.subr.mxu0 0.0
    %240 = vmatpush1.msra.mxu0 0.0
    %241 = vmatprep.subr.mxu0 0.0
    %242 = vmatpush1.msra.mxu0 0.0
    %243 = vmatprep.subr.mxu0 0.0
    %244 = vmatpush1.msra.mxu0 0.0
    %245 = vmatprep.subr.mxu0 0.0
    %246 = vmatpush1.msra.mxu0 0.0
    %247 = vmatprep.subr.mxu0 0.0
    %248 = vmatpush1.msra.mxu0 0.0
    %249 = vmatprep.subr.mxu0 0.0
    %250 = vmatpush1.msra.mxu0 0.0
    %251 = vmatprep.mubr.f32.mxu0 0.0
    %252 = vmatmul.mubr.f32.gmra.mrb[0].mxu0 %v182
    %v253 = vpop.f32.mrb[0].mxu0
    %v254 = vadd.f32 %v164, %v253
    %v255 = vpop.f32.mrb[0].mxu0
    %256 = vdwg.mxu0
    %v257 = vld [vmem:[%s4] sm:$0x1]
    %v259 = vlaneseq
    %v260 = vshrl.u32 %v259, 7
    %v261 = vsub.s32 0, %v260
    %v262 = vrot.slane %v257, %v261
    %v264 = vadd.f32 %v254, %v262
    %v265 = vmax.f32 %v264, 0.0
    %v266 = vld [vmem:[#allocation7] sm:$0xff]
    %v267 = vld [vmem:[#allocation7 + $0x8] sm:$0xff]
    %v268 = vld [vmem:[#allocation7 + $0x10] sm:$0xff]
    %v269 = vld [vmem:[#allocation7 + $0x18] sm:$0xff]
    %v270 = vld [vmem:[%s6] sm:$0x1]
    %v272 = vlaneseq
    %v273 = vshrl.u32 %v272, 7
    %v274 = vsub.s32 0, %v273
    %v275 = vrot.slane %v270, %v274
    %v278 = vsel %vm93, %v265, 0
    %280 = vmatprep.subr.mxu0 0.0
    %281 = vmatpush1.msra.mxu0 %v266
    %282 = vmatprep.subr.mxu0 0.0
    %283 = vmatpush1.msra.mxu0 %v267
    %284 = vmatprep.subr.mxu0 0.0
    %285 = vmatpush1.msra.mxu0 %v268
    %286 = vmatprep.subr.mxu0 0.0
    %287 = vmatpush1.msra.mxu0 %v269
    %288 = vmatprep.subr.mxu0 0.0
    %289 = vmatpush1.msra.mxu0 0.0
    %290 = vmatprep.subr.mxu0 0.0
    %291 = vmatpush1.msra.mxu0 0.0
    %292 = vmatprep.subr.mxu0 0.0
    %293 = vmatpush1.msra.mxu0 0.0
    %294 = vmatprep.subr.mxu0 0.0
    %295 = vmatpush1.msra.mxu0 0.0
    %296 = vmatprep.subr.mxu0 0.0
    %297 = vmatpush1.msra.mxu0 0.0
    %298 = vmatprep.subr.mxu0 0.0
    %299 = vmatpush1.msra.mxu0 0.0
    %300 = vmatprep.subr.mxu0 0.0
    %301 = vmatpush1.msra.mxu0 0.0
    %302 = vmatprep.subr.mxu0 0.0
    %303 = vmatpush1.msra.mxu0 0.0
    %304 = vmatprep.subr.mxu0 0.0
    %305 = vmatpush1.msra.mxu0 0.0
    %306 = vmatprep.subr.mxu0 0.0
    %307 = vmatpush1.msra.mxu0 0.0
    %308 = vmatprep.subr.mxu0 0.0
    %309 = vmatpush1.msra.mxu0 0.0
    %310 = vmatprep.subr.mxu0 0.0
    %311 = vmatpush1.msra.mxu0 0.0
    %312 = vmatprep.subr.mxu0 0.0
    %313 = vmatpush1.msra.mxu0 0.0
    %314 = vmatprep.subr.mxu0 0.0
    %315 = vmatpush1.msra.mxu0 0.0
    %316 = vmatprep.subr.mxu0 0.0
    %317 = vmatpush1.msra.mxu0 0.0
    %318 = vmatprep.subr.mxu0 0.0
    %319 = vmatpush1.msra.mxu0 0.0
    %320 = vmatprep.subr.mxu0 0.0
    %321 = vmatpush1.msra.mxu0 0.0
    %322 = vmatprep.subr.mxu0 0.0
    %323 = vmatpush1.msra.mxu0 0.0
    %324 = vmatprep.subr.mxu0 0.0
    %325 = vmatpush1.msra.mxu0 0.0
    %326 = vmatprep.subr.mxu0 0.0
    %327 = vmatpush1.msra.mxu0 0.0
    %328 = vmatprep.subr.mxu0 0.0
    %329 = vmatpush1.msra.mxu0 0.0
    %330 = vmatprep.subr.mxu0 0.0
    %331 = vmatpush1.msra.mxu0 0.0
    %332 = vmatprep.subr.mxu0 0.0
    %333 = vmatpush1.msra.mxu0 0.0
    %334 = vmatprep.subr.mxu0 0.0
    %335 = vmatpush1.msra.mxu0 0.0
    %336 = vmatprep.subr.mxu0 0.0
    %337 = vmatpush1.msra.mxu0 0.0
    %338 = vmatprep.subr.mxu0 0.0
    %339 = vmatpush1.msra.mxu0 0.0
    %340 = vmatprep.subr.mxu0 0.0
    %341 = vmatpush1.msra.mxu0 0.0
    %342 = vmatprep.subr.mxu0 0.0
    %343 = vmatpush1.msra.mxu0 0.0
    %344 = vmatprep.mubr.f32.mxu0 0.0
    %345 = vmatmul.mubr.f32.gmra.mrb[0].mxu0 %v278
    %v346 = vpop.f32.mrb[0].mxu0
    %v347 = vadd.f32 %v275, %v346
    %v348 = vpop.f32.mrb[0].mxu0
    %349 = vdwg.mxu0
    %350 = vst [vmem:[#allocation8] sm:$0x3] %v347
    // Predicated region
    $region42: #{tpu_custom_call.1} parent=1 // pred_check
      _
    $region43: #{tpu_custom_call.1} parent=1 // pred_check_branch
      %352 = sbr.rel (0) target = $region45
    $region44: #{tpu_custom_call.1} parent=1 // pred_region
      %s354 = ssub.s32 32, 32
      %355 = vsyncadd [#allocation4], %s354
      %s357 = sshll.u32 [#allocation8], 4
      %s358 = int_to_ptr.vmem [resolvable:$true] %s357
      %360 = dma.vmem_to_hbm [thread:$0]  %s358, 32, %s7, [#allocation4]
    $region45: #{tpu_custom_call.1} parent=1 // pred_fallthru
      _
    // Predicated region
    $region46: #{tpu_custom_call.1} parent=1 // pred_check
      _
    $region47: #{tpu_custom_call.1} parent=1 // pred_check_branch
      %362 = sbr.rel (0) target = $region49
    $region48: #{tpu_custom_call.1} parent=1 // pred_region
      %363 = dma.done [#allocation4], 32
    $region49: #{tpu_custom_call.1} parent=1 // pred_fallthru
      _
    %364 = vsyncpa [#allocation3], 1
    %365 = vsyncpa [#allocation6], 1
    %366 = vsyncpa [#allocation4], 1

</llo_original>
